<compile_context>
chip_gen: v6e
topology: v6e:2x2x1
jax: 0.10.0
libtpu: 0.0.40
codegen_flags: <defaults>
</compile_context>

<pallas_src>
import functools

import jax
import jax.numpy as jnp
from jax.experimental import pallas as pl
from jax.experimental.pallas import tpu as pltpu

_NEG_BIAS = -1e30   # bias of padded vocab columns (finite => no inf-inf NaNs)


def _round_up(x, m):
    return ((x + m - 1) // m) * m


def _choose_row_tile(batch, s_pad, rows_per_tile):
    """Batches per row tile (tb) and padded batch count.  tb is either the full
    (padded) batch (single row tile) or a multiple of 8 so every output block's
    second-to-last dim respects the (8, 128) layout rule."""
    tb = max(1, rows_per_tile // s_pad)
    if tb >= batch:
        return batch, batch
    tb = max(8, (tb // 8) * 8)
    if tb >= batch:
        return batch, batch
    return tb, _round_up(batch, tb)


def generator2_kernel(x_ref, w_ref, b_ref, m_ref, lse_ref, m_run, s_run, *,
                      tb, seq):
    # x_ref : (tb*seq, D) bf16  row tile, resident across the vocab sweep
    # w_ref : (D, tv)     bf16  weight tile, streamed per (row, vocab) step
    # b_ref : (1, tv)     f32   bias tile
    # m_ref : (tb, tv)    f32   out tile: seq-max logits + bias (un-normalized)
    # lse_ref:(tb, 1)     f32   out: logsumexp over the full (padded) vocab
    # m_run, s_run: (tb,1) f32  VMEM scratch: online-logsumexp carry
    j = pl.program_id(1)                      # vocab tile index (innermost)

    @pl.when(j == 0)                          # re-init for each row tile
    def _():
        m_run[...] = jnp.full_like(m_run, -jnp.inf)
        s_run[...] = jnp.zeros_like(s_run)

    tv = w_ref.shape[1]

    # One MXU matmul over all rows of this row tile, f32 accumulation.
    logits = jnp.dot(x_ref[...], w_ref[...],
                     preferred_element_type=jnp.float32)            # (tb*seq, tv)

    # Max over the sequence axis (seq is a multiple of 8, so the reshape stays
    # (8,128)-aligned), then add the bias once per batch row.
    lm = jnp.max(logits.reshape(tb, seq, tv), axis=1) + b_ref[...]  # (tb, tv)

    # Emit this vocab tile of the un-normalized seq-max logits (lane-dense).
    m_ref[...] = lm

    # Online logsumexp over the vocab axis.
    tile_max = jnp.max(lm, axis=1, keepdims=True)                   # (tb, 1)
    m_new = jnp.maximum(m_run[...], tile_max)
    s_run[...] = (s_run[...] * jnp.exp(m_run[...] - m_new)
                  + jnp.sum(jnp.exp(lm - m_new), axis=1, keepdims=True))
    m_run[...] = m_new

    @pl.when(j == pl.num_programs(1) - 1)
    def _():
        lse_ref[...] = m_run[...] + jnp.log(s_run[...])


def prepare_generator2_params(w, b, *, tv=512):
    """One-time weight prep (outside the hot path): transpose nn.Linear's (V, D)
    weight to (D, V), pad the vocab to a multiple of the vocab tile, cast to
    bf16, and set the padded bias columns to -1e30 so they never affect the
    seq-max output nor the logsumexp."""
    vocab, _ = w.shape
    tv = min(tv, _round_up(vocab, 128))
    assert tv % 128 == 0, "vocab tile must be a multiple of 128"
    v_pad = _round_up(vocab, tv)
    w_t = jnp.transpose(w).astype(jnp.bfloat16)                     # (D, V)
    b = b.astype(jnp.float32)
    if v_pad > vocab:
        w_t = jnp.pad(w_t, ((0, 0), (0, v_pad - vocab)))
        b = jnp.pad(b, (0, v_pad - vocab), constant_values=_NEG_BIAS)
    return w_t, b.reshape(1, v_pad), tv


def generator2_forward(x, w_t, b2, *, vocab, tv, rows_per_tile=1024):
    """x: (B, S, D) f32.  w_t: (D, V_pad) bf16 and b2: (1, V_pad) f32 from
    prepare_generator2_params.  Returns (B, vocab) f32 log-probs."""
    B, S, D = x.shape
    v_pad = w_t.shape[1]
    assert w_t.dtype == jnp.bfloat16 and v_pad % tv == 0

    # Pad the sequence to a multiple of 8 by repeating the last real position
    # (keeps the in-kernel reshape aligned; the max over seq is unchanged).
    s_pad = _round_up(S, 8)
    if s_pad > S:
        x = jnp.concatenate(
            [x, jnp.broadcast_to(x[:, -1:, :], (B, s_pad - S, D))], axis=1)

    # Pad the batch to a multiple of the row tile (padded rows are sliced off).
    tb, b_pad = _choose_row_tile(B, s_pad, rows_per_tile)
    if b_pad > B:
        x = jnp.pad(x, ((0, b_pad - B), (0, 0), (0, 0)))

    rows = tb * s_pad
    x2 = x.reshape(b_pad * s_pad, D).astype(jnp.bfloat16)

    n_row_tiles = b_pad // tb
    n_vocab_tiles = v_pad // tv

    kernel = functools.partial(generator2_kernel, tb=tb, seq=s_pad)

    # VMEM budget: double-buffered x / weight / bias / output tiles plus the
    # materialized (rows, tv) f32 logits, with headroom for compiler scratch.
    est = (2 * (rows * D * 2 + D * tv * 2 + tv * 4 + tb * tv * 4 + tb * 4)
           + rows * tv * 4 + 4 * tb * 4)
    vmem_limit = int(min(max(2 * est + (8 << 20), 32 << 20), 64 << 20))

    cost = pl.CostEstimate(
        flops=2 * b_pad * s_pad * D * v_pad,
        transcendentals=b_pad * v_pad,
        bytes_accessed=(b_pad * s_pad * D * 2             # x streamed once
                        + n_row_tiles * D * v_pad * 2     # weight, once per row tile
                        + v_pad * 4 + b_pad * v_pad * 4 + b_pad * 4),
    )

    m_out, lse = pl.pallas_call(
        kernel,
        out_shape=(
            jax.ShapeDtypeStruct((b_pad, v_pad), jnp.float32),  # seq-max logits + bias
            jax.ShapeDtypeStruct((b_pad, 1), jnp.float32),      # logsumexp over vocab
        ),
        grid_spec=pltpu.PrefetchScalarGridSpec(
            num_scalar_prefetch=0,
            grid=(n_row_tiles, n_vocab_tiles),                  # vocab innermost
            in_specs=[
                pl.BlockSpec((rows, D), lambda i, j: (i, 0)),   # x row tile
                pl.BlockSpec((D, tv), lambda i, j: (0, j)),     # weight tile
                pl.BlockSpec((1, tv), lambda i, j: (0, j)),     # bias tile
            ],
            out_specs=[
                pl.BlockSpec((tb, tv), lambda i, j: (i, j)),    # lane-dense stores
                pl.BlockSpec((tb, 1), lambda i, j: (i, 0)),     # written at last vocab tile
            ],
            scratch_shapes=[
                pltpu.VMEM((tb, 1), jnp.float32),               # running max
                pltpu.VMEM((tb, 1), jnp.float32),               # running sum
            ],
        ),
        compiler_params=pltpu.CompilerParams(
            # Row tiles are independent -> "parallel" (dual-TC on v7x);
            # the vocab axis carries the online logsumexp -> "arbitrary".
            dimension_semantics=("parallel", "arbitrary"),
            vmem_limit_bytes=vmem_limit,
        ),
        cost_estimate=cost,
    )(x2, w_t, b2)

    # log_softmax = m - logsumexp(m).  Slice off the batch/vocab padding first;
    # under jit XLA fuses this subtract into the consumer (no extra HBM pass).
    return m_out[:B, :vocab] - lse[:B]


def generator2_ref(x, w, b):
    """Pure-JAX reference matching the PyTorch forward, with bf16 operands and
    f32 accumulation to mirror the kernel's MXU precision."""
    y = jnp.einsum("bsd,vd->bsv", x.astype(jnp.bfloat16), w.astype(jnp.bfloat16),
                   preferred_element_type=jnp.float32) + b[None, None, :]
    m = jnp.max(y, axis=1)                                           # (B, V)
    return jax.nn.log_softmax(m, axis=1)                             # (B, V)


if __name__ == "__main__":
    # Small shapes consistent with the module, chosen to exercise every path:
    #   batch=16 with rows_per_tile=64  -> 2 "parallel" row tiles,
    #   seq=7                            -> padded to 8 (aligned reshape),
    #   vocab=300 with tv=128            -> 3 vocab tiles, last one partially
    #                                       padded & masked via -1e30 bias.
    B, S, D, V = 16, 7, 32, 300

    key = jax.random.PRNGKey(0)
    kx, kw, kb = jax.random.split(key, 3)

    x = jax.random.normal(kx, (B, S, D), dtype=jnp.float32)

    # nn.Linear(d_model, vocab): weight (V, D), bias (V,), U(-1/sqrt(D), 1/sqrt(D)).
    bound = 1.0 / (D ** 0.5)
    w = jax.random.uniform(kw, (V, D), minval=-bound, maxval=bound, dtype=jnp.float32)
    b = jax.random.uniform(kb, (V,), minval=-bound, maxval=bound, dtype=jnp.float32)

    # One-time weight prep (transpose / vocab pad / bf16 cast) outside the hot path.
    w_t, b2, tv = prepare_generator2_params(w, b, tv=128)

    fwd = jax.jit(functools.partial(generator2_forward, vocab=V, tv=tv,
                                    rows_per_tile=64))
    out = jax.block_until_ready(fwd(x, w_t, b2))

    ref = generator2_ref(x, w, b)

    assert out.shape == (B, V)
    assert bool(jnp.all(jnp.isfinite(out)))
    assert jnp.allclose(out, ref, atol=1e-4, rtol=1e-4), (
        "mismatch vs reference, max abs err = "
        + str(float(jnp.max(jnp.abs(out - ref)))))

    print("KERNEL_OK")
</pallas_src>

<mosaic_0001>
module attributes {stable_mosaic.version = 11 : i64} {
  func.func @generator2_kernel(%arg0: i32, %arg1: i32, %arg2: memref<64x32xbf16, #tpu.memory_space<vmem>>, %arg3: memref<32x128xbf16, #tpu.memory_space<vmem>>, %arg4: memref<1x128xf32, #tpu.memory_space<vmem>>, %arg5: memref<8x128xf32, #tpu.memory_space<vmem>>, %arg6: memref<8x1xf32, #tpu.memory_space<vmem>>, %arg7: memref<8x1xf32, #tpu.memory_space<vmem>>, %arg8: memref<8x1xf32, #tpu.memory_space<vmem>>) attributes {dimension_semantics = [#tpu.dimension_semantics<parallel>, #tpu.dimension_semantics<arbitrary>], iteration_bounds = array<i64: 2, 3>, scalar_prefetch = 0 : i64, scratch_operands = 2 : i64, tpu.core_type = #tpu.core_type<tc>, window_params = [{transform_indices = @transform_0, window_bounds = array<i64: 64, 32>}, {transform_indices = @transform_1, window_bounds = array<i64: 32, 128>}, {transform_indices = @transform_2, window_bounds = array<i64: 1, 128>}, {transform_indices = @transform_3, window_bounds = array<i64: 8, 128>}, {transform_indices = @transform_4, window_bounds = array<i64: 8, 1>}]} {
    %c0_i32 = arith.constant 0 : i32
    %0 = arith.cmpi eq, %arg1, %c0_i32 : i32
    %1 = arith.extui %0 : i1 to i32
    %c0_i32_0 = arith.constant 0 : i32
    %2 = arith.cmpi ne, %1, %c0_i32_0 : i32
    scf.if %2 {
      %cst_22 = arith.constant 0xFF800000 : f32
      %32 = vector.broadcast %cst_22 : f32 to vector<8x1xf32>
      %c0_23 = arith.constant 0 : index
      %c0_24 = arith.constant 0 : index
      %33 = vector.load %arg7[%c0_23, %c0_24] : memref<8x1xf32, #tpu.memory_space<vmem>>, vector<8x1xf32>
      tpu.vector_store %arg7[%c0_23, %c0_24], %32 {strides = array<i32>} : memref<8x1xf32, #tpu.memory_space<vmem>>, vector<8x1xf32>,
      %cst_25 = arith.constant 0.000000e+00 : f32
      %34 = vector.broadcast %cst_25 : f32 to vector<8x1xf32>
      %c0_26 = arith.constant 0 : index
      %c0_27 = arith.constant 0 : index
      %35 = vector.load %arg8[%c0_26, %c0_27] : memref<8x1xf32, #tpu.memory_space<vmem>>, vector<8x1xf32>
      tpu.vector_store %arg8[%c0_26, %c0_27], %34 {strides = array<i32>} : memref<8x1xf32, #tpu.memory_space<vmem>>, vector<8x1xf32>,
    } else {
    }
    %c0 = arith.constant 0 : index
    %c0_1 = arith.constant 0 : index
    %3 = vector.load %arg2[%c0, %c0_1] : memref<64x32xbf16, #tpu.memory_space<vmem>>, vector<64x32xbf16>
    %c0_2 = arith.constant 0 : index
    %c0_3 = arith.constant 0 : index
    %4 = vector.load %arg3[%c0_2, %c0_3] : memref<32x128xbf16, #tpu.memory_space<vmem>>, vector<32x128xbf16>
    %cst = arith.constant dense<0.000000e+00> : vector<64x128xf32>
    %5 = tpu.matmul %3, %4, %cst {dimension_numbers = #tpu.dot_dimension_numbers<[1], [0], [0], [1], [0, 0, 1, 1], [], []>} : vector<64x32xbf16>, vector<32x128xbf16>, vector<64x128xf32> -> vector<64x128xf32>
    %6 = vector.shape_cast %5 : vector<64x128xf32> to vector<8x8x128xf32>
    %cst_4 = arith.constant dense<0xFF800000> : vector<8x128xf32>
    %7 = vector.multi_reduction <maximumf>, %6, %cst_4 [1] : vector<8x8x128xf32> to vector<8x128xf32>
    %c0_5 = arith.constant 0 : index
    %c0_6 = arith.constant 0 : index
    %8 = vector.load %arg4[%c0_5, %c0_6] : memref<1x128xf32, #tpu.memory_space<vmem>>, vector<1x128xf32>
    %9 = vector.broadcast %8 : vector<1x128xf32> to vector<8x128xf32>
    %10 = arith.addf %7, %9 : vector<8x128xf32>
    %c0_7 = arith.constant 0 : index
    %c0_8 = arith.constant 0 : index
    %11 = vector.load %arg5[%c0_7, %c0_8] : memref<8x128xf32, #tpu.memory_space<vmem>>, vector<8x128xf32>
    tpu.vector_store %arg5[%c0_7, %c0_8], %10 {strides = array<i32>} : memref<8x128xf32, #tpu.memory_space<vmem>>, vector<8x128xf32>,
    %cst_9 = arith.constant dense<0xFF800000> : vector<8xf32>
    %12 = vector.multi_reduction <maximumf>, %10, %cst_9 [1] : vector<8x128xf32> to vector<8xf32>
    %13 = vector.shape_cast %12 : vector<8xf32> to vector<8x1xf32>
    %c0_10 = arith.constant 0 : index
    %c0_11 = arith.constant 0 : index
    %14 = vector.load %arg7[%c0_10, %c0_11] : memref<8x1xf32, #tpu.memory_space<vmem>>, vector<8x1xf32>
    %15 = arith.maximumf %14, %13 : vector<8x1xf32>
    %c0_12 = arith.constant 0 : index
    %c0_13 = arith.constant 0 : index
    %16 = vector.load %arg8[%c0_12, %c0_13] : memref<8x1xf32, #tpu.memory_space<vmem>>, vector<8x1xf32>
    %c0_14 = arith.constant 0 : index
    %c0_15 = arith.constant 0 : index
    %17 = vector.load %arg7[%c0_14, %c0_15] : memref<8x1xf32, #tpu.memory_space<vmem>>, vector<8x1xf32>
    %18 = arith.subf %17, %15 : vector<8x1xf32>
    %19 = math.exp %18 : vector<8x1xf32>
    %20 = arith.mulf %16, %19 : vector<8x1xf32>
    %21 = vector.broadcast %15 : vector<8x1xf32> to vector<8x128xf32>
    %22 = arith.subf %10, %21 : vector<8x128xf32>
    %23 = math.exp %22 : vector<8x128xf32>
    %cst_16 = arith.constant dense<0.000000e+00> : vector<8xf32>
    %24 = vector.multi_reduction <add>, %23, %cst_16 [1] : vector<8x128xf32> to vector<8xf32>
    %25 = vector.shape_cast %24 : vector<8xf32> to vector<8x1xf32>
    %26 = arith.addf %20, %25 : vector<8x1xf32>
    %c0_17 = arith.constant 0 : index
    %c0_18 = arith.constant 0 : index
    %27 = vector.load %arg8[%c0_17, %c0_18] : memref<8x1xf32, #tpu.memory_space<vmem>>, vector<8x1xf32>
    tpu.vector_store %arg8[%c0_17, %c0_18], %26 {strides = array<i32>} : memref<8x1xf32, #tpu.memory_space<vmem>>, vector<8x1xf32>,
    %c0_19 = arith.constant 0 : index
    %c0_20 = arith.constant 0 : index
    %28 = vector.load %arg7[%c0_19, %c0_20] : memref<8x1xf32, #tpu.memory_space<vmem>>, vector<8x1xf32>
    tpu.vector_store %arg7[%c0_19, %c0_20], %15 {strides = array<i32>} : memref<8x1xf32, #tpu.memory_space<vmem>>, vector<8x1xf32>,
    %c2_i32 = arith.constant 2 : i32
    %29 = arith.cmpi eq, %arg1, %c2_i32 : i32
    %30 = arith.extui %29 : i1 to i32
    %c0_i32_21 = arith.constant 0 : i32
    %31 = arith.cmpi ne, %30, %c0_i32_21 : i32
    scf.if %31 {
      %c0_22 = arith.constant 0 : index
      %c0_23 = arith.constant 0 : index
      %32 = vector.load %arg7[%c0_22, %c0_23] : memref<8x1xf32, #tpu.memory_space<vmem>>, vector<8x1xf32>
      %c0_24 = arith.constant 0 : index
      %c0_25 = arith.constant 0 : index
      %33 = vector.load %arg8[%c0_24, %c0_25] : memref<8x1xf32, #tpu.memory_space<vmem>>, vector<8x1xf32>
      %34 = math.log %33 : vector<8x1xf32>
      %35 = arith.addf %32, %34 : vector<8x1xf32>
      %c0_26 = arith.constant 0 : index
      %c0_27 = arith.constant 0 : index
      %36 = vector.load %arg6[%c0_26, %c0_27] : memref<8x1xf32, #tpu.memory_space<vmem>>, vector<8x1xf32>
      tpu.vector_store %arg6[%c0_26, %c0_27], %35 {strides = array<i32>} : memref<8x1xf32, #tpu.memory_space<vmem>>, vector<8x1xf32>,
    } else {
    }
    return
  }
  func.func @transform_0(%arg0: i32, %arg1: i32) -> (i32, i32) {
    %c0_i32 = arith.constant 0 : i32
    %c0_i32_0 = arith.constant 0 : i32
    return %arg0, %c0_i32 : i32, i32
  }
  func.func @transform_1(%arg0: i32, %arg1: i32) -> (i32, i32) {
    %c0_i32 = arith.constant 0 : i32
    %c0_i32_0 = arith.constant 0 : i32
    return %c0_i32, %arg1 : i32, i32
  }
  func.func @transform_2(%arg0: i32, %arg1: i32) -> (i32, i32) {
    %c0_i32 = arith.constant 0 : i32
    %c0_i32_0 = arith.constant 0 : i32
    return %c0_i32, %arg1 : i32, i32
  }
  func.func @transform_3(%arg0: i32, %arg1: i32) -> (i32, i32) {
    %c0_i32 = arith.constant 0 : i32
    return %arg0, %arg1 : i32, i32
  }
  func.func @transform_4(%arg0: i32, %arg1: i32) -> (i32, i32) {
    %c0_i32 = arith.constant 0 : i32
    %c0_i32_0 = arith.constant 0 : i32
    return %arg0, %c0_i32 : i32, i32
  }
}

</mosaic_0001>

<llo_original>
// kernel: generator2_forward.1
$region0: #{generator2_forward.1}
  #allocation0 [shape = 'u32[]', space=smem, size = 0x4, offset = 0x4, fixed_abs, tag = 'smem constant byte address 0x4 - core index']
  #allocation1 [shape = 'u32[144,128]{1,0:T(1,128)}', space=vmem, size = 0x12000, scoped, tag = 'internal scratch']
  #allocation2 [shape = 'f32[8,1]{1,0:T(8,128)}', space=vmem, size = 0x1000, scoped, tag = 'scratch operand']
  #allocation3 [shape = 'f32[8,1]{1,0:T(8,128)}', space=vmem, size = 0x1000, scoped, tag = 'scratch operand']
  %s0 = inlined_call_operand.vmem [shape: bf16[128,32], index: 0, kind: input, shape index: {}]
  %s1 = inlined_call_operand.vmem [shape: bf16[32,384], index: 1, kind: input, shape index: {}]
  %s2 = inlined_call_operand.vmem [shape: f32[1,384], index: 2, kind: input, shape index: {}]
  %s3 = inlined_call_operand.vmem [shape: f32[16,384], index: 3, kind: output, shape index: {0}]
  %s4 = inlined_call_operand.vmem [shape: f32[16,1], index: 4, kind: output, shape index: {1}]
  %5 = xla_tuple %s3, %s4
  %s6 = sld [smem:[#allocation0]]
  $region102: #{generator2_forward.1} parent=0
    _
  %s8 = ssub.s32 1, %s6
  %s9 = scalar_select 0, %s8, %s6
  $region1: #{generator2_forward.1} parent=0
    #allocation4 [shape = 'u8[16384]{0}', space=vmem, size = 0x4000, scoped, tag = 'input window, operand 1']
    loop: start=0, step=1, limit=8
    $region2: #{generator2_forward.1} parent=1 // loop_pre_header
      _
    $region3: #{generator2_forward.1} parent=1 // loop_header
      %s11 = sphi 0, %s15
      %p12 = scmp.ge.s32.totalorder %s11, 8
      %s18 = sphi 0, %s30
      %s19 = sphi 0, %s26
      %s20 = sphi 0, %s18
      %s21 = sphi 0, %s19
      %s22 = sphi 0, %s20
      %s23 = sphi 0, %s21
      %s33 = sphi 0, %s35
      %s36 = sphi 0, %s33
      %s37 = sphi 0, %s36
      %s53 = sphi 0, %s37
      %s59 = sphi 0, %s61
      %s62 = sphi 0, %s59
      %s63 = sphi 0, %s62
      %s79 = sphi 0, %s63
      %s85 = sphi 0, %s87
      %s88 = sphi 0, %s85
      %s89 = sphi 0, %s88
      %s105 = sphi 0, %s89
      %s113 = sphi 0, %s115
      %s116 = sphi 0, %s113
      %s117 = sphi 0, %s116
      %s133 = sphi 0, %s117
      %s139 = sphi 0, %s141
      %s142 = sphi 0, %s139
      %s143 = sphi 0, %s142
      %s159 = sphi 0, %s143
    $region4: #{generator2_forward.1} parent=1 // loop_header_branch
      %14 = sbr.rel (%p12) target = $region8
    $region5: #{generator2_forward.1} parent=1 // loop_body
      %s16 = ssub.s32 %s11, 1
      %s17 = ssub.s32 %s11, 2
      %s24 = sadd.s32 1, %s19
      %p25 = scmp.ge.s32.totalorder %s24, 3
      %s26 = scalar_select %p25, 0, %s24
      %s27 = sadd.s32 1, %s18
      %s28 = scalar_select %p25, %s27, %s18
      %p29 = scmp.ge.s32.totalorder %s28, 2
      %s30 = scalar_select %p29, 0, %s28
      %s31 = ssub.s32 %s18, %s30
      %p32 = scmp.eq.s32.totalorder %s31, 0
      %s34 = sadd.s32 %s33, 1
      %s35 = scalar_select %p32, %s33, %s34
      %p38 = pneg %p32
      %p39 = scmp.eq.s32.totalorder %s11, 5
      %p40 = por %p38, %p39
      %p41 = scmp.ne.s32.totalorder %s33, %s36
      %p42 = scmp.eq.s32.totalorder %s11, 0
      %p43 = por %p41, %p42
      %p44 = scmp.ne.s32.totalorder %s33, %s36
      %p45 = scmp.eq.s32.totalorder %s16, 5
      %p46 = por %p44, %p45
      %p47 = scmp.ne.s32.totalorder %s36, %s37
      %p48 = scmp.eq.s32.totalorder %s16, 0
      %p49 = por %p47, %p48
      %p50 = scmp.ne.s32.totalorder %s36, %s37
      %p51 = scmp.eq.s32.totalorder %s17, 5
      %p52 = por %p50, %p51
      %p54 = scmp.ne.s32.totalorder %s37, %s53
      %p55 = scmp.eq.s32.totalorder %s17, 0
      %p56 = por %p54, %p55
      %s57 = ssub.s32 %s19, %s26
      %p58 = scmp.eq.s32.totalorder %s57, 0
      %s60 = sadd.s32 %s59, 1
      %s61 = scalar_select %p58, %s59, %s60
      %p64 = pneg %p58
      %p65 = scmp.eq.s32.totalorder %s11, 5
      %p66 = por %p64, %p65
      %p67 = scmp.ne.s32.totalorder %s59, %s62
      %p68 = scmp.eq.s32.totalorder %s11, 0
      %p69 = por %p67, %p68
      %p70 = scmp.ne.s32.totalorder %s59, %s62
      %p71 = scmp.eq.s32.totalorder %s16, 5
      %p72 = por %p70, %p71
      %p73 = scmp.ne.s32.totalorder %s62, %s63
      %p74 = scmp.eq.s32.totalorder %s16, 0
      %p75 = por %p73, %p74
      %p76 = scmp.ne.s32.totalorder %s62, %s63
      %p77 = scmp.eq.s32.totalorder %s17, 5
      %p78 = por %p76, %p77
      %p80 = scmp.ne.s32.totalorder %s63, %s79
      %p81 = scmp.eq.s32.totalorder %s17, 0
      %p82 = por %p80, %p81
      %s83 = ssub.s32 %s19, %s26
      %p84 = scmp.eq.s32.totalorder %s83, 0
      %s86 = sadd.s32 %s85, 1
      %s87 = scalar_select %p84, %s85, %s86
      %p90 = pneg %p84
      %p91 = scmp.eq.s32.totalorder %s11, 5
      %p92 = por %p90, %p91
      %p93 = scmp.ne.s32.totalorder %s85, %s88
      %p94 = scmp.eq.s32.totalorder %s11, 0
      %p95 = por %p93, %p94
      %p96 = scmp.ne.s32.totalorder %s85, %s88
      %p97 = scmp.eq.s32.totalorder %s16, 5
      %p98 = por %p96, %p97
      %p99 = scmp.ne.s32.totalorder %s88, %s89
      %p100 = scmp.eq.s32.totalorder %s16, 0
      %p101 = por %p99, %p100
      %p102 = scmp.ne.s32.totalorder %s88, %s89
      %p103 = scmp.eq.s32.totalorder %s17, 5
      %p104 = por %p102, %p103
      %p106 = scmp.ne.s32.totalorder %s89, %s105
      %p107 = scmp.eq.s32.totalorder %s17, 0
      %p108 = por %p106, %p107
      %s109 = ssub.s32 %s18, %s30
      %s110 = ssub.s32 %s19, %s26
      %s111 = sor.u32 %s109, %s110
      %p112 = scmp.eq.s32.totalorder %s111, 0
      %s114 = sadd.s32 %s113, 1
      %s115 = scalar_select %p112, %s113, %s114
      %p118 = pneg %p112
      %p119 = scmp.eq.s32.totalorder %s11, 5
      %p120 = por %p118, %p119
      %p121 = scmp.ne.s32.totalorder %s113, %s116
      %p122 = scmp.eq.s32.totalorder %s11, 0
      %p123 = por %p121, %p122
      %p124 = scmp.ne.s32.totalorder %s113, %s116
      %p125 = scmp.eq.s32.totalorder %s16, 5
      %p126 = por %p124, %p125
      %p127 = scmp.ne.s32.totalorder %s116, %s117
      %p128 = scmp.eq.s32.totalorder %s16, 0
      %p129 = por %p127, %p128
      %p130 = scmp.ne.s32.totalorder %s116, %s117
      %p131 = scmp.eq.s32.totalorder %s17, 5
      %p132 = por %p130, %p131
      %p134 = scmp.ne.s32.totalorder %s117, %s133
      %p135 = scmp.eq.s32.totalorder %s17, 0
      %p136 = por %p134, %p135
      %s137 = ssub.s32 %s18, %s30
      %p138 = scmp.eq.s32.totalorder %s137, 0
      %s140 = sadd.s32 %s139, 1
      %s141 = scalar_select %p138, %s139, %s140
      %p144 = pneg %p138
      %p145 = scmp.eq.s32.totalorder %s11, 5
      %p146 = por %p144, %p145
      %p147 = scmp.ne.s32.totalorder %s139, %s142
      %p148 = scmp.eq.s32.totalorder %s11, 0
      %p149 = por %p147, %p148
      %p150 = scmp.ne.s32.totalorder %s139, %s142
      %p151 = scmp.eq.s32.totalorder %s16, 5
      %p152 = por %p150, %p151
      %p153 = scmp.ne.s32.totalorder %s142, %s143
      %p154 = scmp.eq.s32.totalorder %s16, 0
      %p155 = por %p153, %p154
      %p156 = scmp.ne.s32.totalorder %s142, %s143
      %p157 = scmp.eq.s32.totalorder %s17, 5
      %p158 = por %p156, %p157
      %p160 = scmp.ne.s32.totalorder %s143, %s159
      %p161 = scmp.eq.s32.totalorder %s17, 0
      %p162 = por %p160, %p161
      %p163 = scmp.le.s32.totalorder 1, %s11
      %p164 = scmp.lt.s32.totalorder %s11, 7
      %p165 = pnand %p163, %p164
      %p166 = pneg %p165
      // Predicated region
      $region9: #{generator2_forward.1} parent=5 // pred_check
        _
      $region10: #{generator2_forward.1} parent=5 // pred_check_branch
        %168 = sbr.rel (%p165) target = $region12
      $region11: #{generator2_forward.1} parent=5 // pred_region
        %s169 = ssub.s32 %s11, 1
      $region12: #{generator2_forward.1} parent=5 // pred_fallthru
        _
      %p170 = scmp.lt.s32.totalorder %s11, 6
      // Predicated region
      $region13: #{generator2_forward.1} parent=5 // pred_check
        %p171 = pneg %p170
      $region14: #{generator2_forward.1} parent=5 // pred_check_branch
        %173 = sbr.rel (%p171) target = $region16
      $region15: #{generator2_forward.1} parent=5 // pred_region
        // Predicated region
        $region17: #{generator2_forward.1} parent=15 // pred_check
          %p174 = pneg %p43
        $region18: #{generator2_forward.1} parent=15 // pred_check_branch
          %176 = sbr.rel (%p174) target = $region20
        $region19: #{generator2_forward.1} parent=15 // pred_region
          %s177 = smul.u32 8, %s18
          %p178 = scmp.lt.s32.totalorder %s177, 15
          %s179 = scalar_select %p178, %s177, 15
          %s180 = smul.addr %s179, 4
          %s181 = scalar_lea.vmem %s0, %s180
          %s182 = smul.u32 8, %s18
        $region20: #{generator2_forward.1} parent=15 // pred_fallthru
          _
        // Predicated region
        $region21: #{generator2_forward.1} parent=15 // pred_check
          %p183 = pneg %p69
        $region22: #{generator2_forward.1} parent=15 // pred_check_branch
          %185 = sbr.rel (%p183) target = $region24
        $region23: #{generator2_forward.1} parent=15 // pred_region
          %s186 = sand.u32 %s59, 1
          %s187 = sand.u32 %s59, 1
          %s188 = smul.addr %s187, 16
          %s189 = scalar_lea.vmem [#allocation4], %s188
          %s190 = smul.addr %s19, 4
          %s191 = scalar_lea.vmem %s1, %s190
          // Predicated region
          $region25: #{generator2_forward.1} parent=23 // pred_check
            _
          $region26: #{generator2_forward.1} parent=23 // pred_check_branch
            %193 = sbr.rel (0) target = $region28
          $region27: #{generator2_forward.1} parent=23 // pred_region
            // Predicated region
            $region29: #{generator2_forward.1} parent=27 // pred_check
              _
            $region30: #{generator2_forward.1} parent=27 // pred_check_branch
              %195 = sbr.rel target = $region32
            $region31: #{generator2_forward.1} parent=27 // pred_region
              // Predicated region
              $region44: #{generator2_forward.1} parent=31 // pred_check
                _
              $region45: #{generator2_forward.1} parent=31 // pred_check_branch
                %217 = sbr.rel (0) target = $region47
              $region46: #{generator2_forward.1} parent=31 // pred_region
                loop: start=0, step=1, limit=1
                $region48: #{generator2_forward.1} parent=46 // loop_pre_header
                  _
                $region49: #{generator2_forward.1} parent=46 // loop_header
                  %s219 = sphi 0, %s223
                  %p220 = scmp.ge.s32.totalorder %s219, 1
                  %s224 = sphi %s191, %s191
                  %s225 = sphi %s189, %s189
                $region50: #{generator2_forward.1} parent=46 // loop_header_branch
                  %222 = sbr.rel (%p220) target = $region54
                $region51: #{generator2_forward.1} parent=46 // loop_body
                  _
                $region52: #{generator2_forward.1} parent=46 // loop_footer
                  %s223 = sadd.s32 1, %s219
                $region53: #{generator2_forward.1} parent=46 // loop_footer_branch
                  %218 = sbr.rel target = $region49
                $region54: #{generator2_forward.1} parent=46 // loop_exit
                  _
                %s227 = ssub.s32 16, 1
                loop: start=0, step=1, limit=1
                $region55: #{generator2_forward.1} parent=46 // loop_pre_header
                  _
                $region56: #{generator2_forward.1} parent=46 // loop_header
                  %s229 = sphi 0, %s233
                  %p230 = scmp.ge.s32.totalorder %s229, 1
                  %s234 = sphi %s191, %s191
                  %s235 = sphi %s189, %s189
                $region57: #{generator2_forward.1} parent=46 // loop_header_branch
                  %232 = sbr.rel (%p230) target = $region61
                $region58: #{generator2_forward.1} parent=46 // loop_body
                  %v236 = vld [vmem:[%s234] sm:%s227]
                  %237 = vst [vmem:[%s235] sm:%s227] %v236
                  %v238 = vld [vmem:[%s234 + $0xc] sm:%s227]
                  %239 = vst [vmem:[%s235 + $0x4] sm:%s227] %v238
                  %v240 = vld [vmem:[%s234 + $0x18] sm:%s227]
                  %241 = vst [vmem:[%s235 + $0x8] sm:%s227] %v240
                  %v242 = vld [vmem:[%s234 + $0x24] sm:%s227]
                  %243 = vst [vmem:[%s235 + $0xc] sm:%s227] %v242
                $region59: #{generator2_forward.1} parent=46 // loop_footer
                  %s233 = sadd.s32 1, %s229
                $region60: #{generator2_forward.1} parent=46 // loop_footer_branch
                  %228 = sbr.rel target = $region56
                $region61: #{generator2_forward.1} parent=46 // loop_exit
                  _
              $region47: #{generator2_forward.1} parent=31 // pred_fallthru
                _
            $region32: #{generator2_forward.1} parent=27 // pred_fallthru
              _
            // Predicated region
            $region33: #{generator2_forward.1} parent=27 // pred_check
              _
            $region34: #{generator2_forward.1} parent=27 // pred_check_branch
              %197 = sbr.rel (0) target = $region36
            $region35: #{generator2_forward.1} parent=27 // pred_region
              %s199 = ssub.s32 16, 1
              loop: start=0, step=1, limit=1
              $region37: #{generator2_forward.1} parent=35 // loop_pre_header
                _
              $region38: #{generator2_forward.1} parent=35 // loop_header
                %s201 = sphi 0, %s205
                %p202 = scmp.ge.s32.totalorder %s201, 1
                %s206 = sphi %s191, %s191
                %s207 = sphi %s189, %s189
              $region39: #{generator2_forward.1} parent=35 // loop_header_branch
                %204 = sbr.rel (%p202) target = $region43
              $region40: #{generator2_forward.1} parent=35 // loop_body
                %v208 = vld [vmem:[%s206] sm:%s199]
                %209 = vst [vmem:[%s207] sm:%s199] %v208
                %v210 = vld [vmem:[%s206 + $0xc] sm:%s199]
                %211 = vst [vmem:[%s207 + $0x4] sm:%s199] %v210
                %v212 = vld [vmem:[%s206 + $0x18] sm:%s199]
                %213 = vst [vmem:[%s207 + $0x8] sm:%s199] %v212
                %v214 = vld [vmem:[%s206 + $0x24] sm:%s199]
                %215 = vst [vmem:[%s207 + $0xc] sm:%s199] %v214
              $region41: #{generator2_forward.1} parent=35 // loop_footer
                %s205 = sadd.s32 1, %s201
              $region42: #{generator2_forward.1} parent=35 // loop_footer_branch
                %200 = sbr.rel target = $region38
              $region43: #{generator2_forward.1} parent=35 // loop_exit
                _
            $region36: #{generator2_forward.1} parent=27 // pred_fallthru
              _
          $region28: #{generator2_forward.1} parent=23 // pred_fallthru
            _
          %244 = vnop
        $region24: #{generator2_forward.1} parent=15 // pred_fallthru
          _
        // Predicated region
        $region62: #{generator2_forward.1} parent=15 // pred_check
          %p245 = pneg %p95
        $region63: #{generator2_forward.1} parent=15 // pred_check_branch
          %247 = sbr.rel (%p245) target = $region65
        $region64: #{generator2_forward.1} parent=15 // pred_region
          %p248 = scmp.lt.s32.totalorder %s19, 2
          %s249 = scalar_select %p248, %s19, 2
          %s250 = scalar_lea.vmem %s2, %s249
        $region65: #{generator2_forward.1} parent=15 // pred_fallthru
          _
      $region16: #{generator2_forward.1} parent=5 // pred_fallthru
        _
      %p251 = scmp.le.s32.totalorder 1, %s11
      %p252 = scmp.lt.s32.totalorder %s11, 7
      %p253 = pnand %p251, %p252
      %p254 = pneg %p253
      // Predicated region
      $region66: #{generator2_forward.1} parent=5 // pred_check
        _
      $region67: #{generator2_forward.1} parent=5 // pred_check_branch
        %256 = sbr.rel (%p253) target = $region69
      $region68: #{generator2_forward.1} parent=5 // pred_region
        %s257 = ssub.s32 %s11, 1
        %s258 = sand.u32 %s62, 1
        %s259 = sand.u32 %s62, 1
        %s260 = smul.addr %s259, 16
        %s261 = scalar_lea.vmem [#allocation4], %s260
        // Predicated region
        $region70: #{generator2_forward.1} parent=68 // pred_check
          %p262 = pneg %p75
        $region71: #{generator2_forward.1} parent=68 // pred_check_branch
          %264 = sbr.rel (%p262) target = $region73
        $region72: #{generator2_forward.1} parent=68 // pred_region
          _
        $region73: #{generator2_forward.1} parent=68 // pred_fallthru
          _
        %s265 = smul.u32 8, %s20
        %p266 = scmp.lt.s32.totalorder %s265, 15
        %s267 = scalar_select %p266, %s265, 15
        %s268 = smul.addr %s267, 4
        %s269 = scalar_lea.vmem %s0, %s268
        %p270 = pneg %p49
        %p271 = pneg %p46
        %s272 = sand.u32 %s62, 1
        %s273 = sand.u32 %s62, 1
        %s274 = smul.addr %s273, 16
        %s275 = scalar_lea.vmem [#allocation4], %s274
        %p276 = pneg %p75
        %p277 = pneg %p72
        %p278 = scmp.lt.s32.totalorder %s21, 2
        %s279 = scalar_select %p278, %s21, 2
        %s280 = scalar_lea.vmem %s2, %s279
        %p281 = pneg %p101
        %p282 = pneg %p98
        %p283 = pneg %p129
        %p284 = pneg %p126
        %p285 = scmp.lt.s32.totalorder %s20, 1
        %s286 = scalar_select %p285, %s20, 1
        %p287 = scmp.lt.s32.totalorder %s21, 2
        %s288 = scalar_select %p287, %s21, 2
        %s289 = smul.addr %s286, 3
        %s290 = sadd.s32 %s288, %s289
        %s291 = smul.addr %s290, 8
        %s292 = scalar_lea.vmem %s3, %s291
        %p293 = pneg %p155
        %p294 = pneg %p152
        %p295 = scmp.lt.s32.totalorder %s20, 1
        %s296 = scalar_select %p295, %s20, 1
        %s297 = smul.addr %s296, 8
        %s298 = scalar_lea.vmem %s4, %s297
        %s299 = smul.u32 8, %s20
        %p300 = scmp.lt.s32.totalorder %s299, 15
        %s301 = scalar_select %p300, %s299, 15
        %s302 = smul.addr %s301, 4
        %s303 = scalar_lea.vmem %s0, %s302
        %s304 = smul.u32 8, %s20
        %p305 = scmp.lt.s32.totalorder %s21, 2
        %s306 = scalar_select %p305, %s21, 2
        %s307 = scalar_lea.vmem %s2, %s306
        %p308 = scmp.lt.s32.totalorder %s20, 1
        %s309 = scalar_select %p308, %s20, 1
        %p310 = scmp.lt.s32.totalorder %s21, 2
        %s311 = scalar_select %p310, %s21, 2
        %s312 = smul.addr %s309, 3
        %s313 = sadd.s32 %s311, %s312
        %s314 = smul.addr %s313, 8
        %s315 = scalar_lea.vmem %s3, %s314
        %p316 = scmp.lt.s32.totalorder %s20, 1
        %s317 = scalar_select %p316, %s20, 1
        %s318 = smul.addr %s317, 8
        %s319 = scalar_lea.vmem %s4, %s318
        %p321 = scmp.eq.s32.totalorder %s21, 0
        // Predicated region
        $region74: #{generator2_forward.1} parent=68 // pred_check
          %p322 = pneg %p321
        $region75: #{generator2_forward.1} parent=68 // pred_check_branch
          %324 = sbr.rel (%p322) target = $region77
        $region76: #{generator2_forward.1} parent=68 // pred_region
          %vm325 = vcmask 7168
          %326 = vst.msk [vmem:[#allocation2] sm:$0xff] %vm325, -inf
          %327 = vst.msk [vmem:[#allocation3] sm:$0xff] %vm325, 0.0
        $region77: #{generator2_forward.1} parent=68 // pred_fallthru
          _
        %v328 = vld [vmem:[%s303] sm:$0xf]
        %v329 = vld [vmem:[%s303 + $0x4] sm:$0xf]
        %v330 = vld [vmem:[%s303 + $0x8] sm:$0xf]
        %v331 = vld [vmem:[%s303 + $0xc] sm:$0xf]
        %v332 = vld [vmem:[%s303 + $0x10] sm:$0xf]
        %v333 = vld [vmem:[%s303 + $0x14] sm:$0xf]
        %v334 = vld [vmem:[%s303 + $0x18] sm:$0xf]
        %v335 = vld [vmem:[%s303 + $0x1c] sm:$0xf]
        %v336 = vld [vmem:[%s261] sm:$0xf]
        %v337 = vld [vmem:[%s261 + $0x4] sm:$0xf]
        %v338 = vld [vmem:[%s261 + $0x8] sm:$0xf]
        %v339 = vld [vmem:[%s261 + $0xc] sm:$0xf]
        %v348 = vunpack.c.l.b16 %v328
        %v349 = vunpack.c.l.b16 %v329
        %v350 = vunpack.c.l.b16 %v330
        %v351 = vunpack.c.l.b16 %v331
        %v352 = vunpack.c.l.b16 %v332
        %v353 = vunpack.c.l.b16 %v333
        %v354 = vunpack.c.l.b16 %v334
        %v355 = vunpack.c.l.b16 %v335
        %v356 = vpack.c.b16 %v349, %v348
        %v357 = vpack.c.b16 %v351, %v350
        %v358 = vpack.c.b16 %v353, %v352
        %v359 = vpack.c.b16 %v355, %v354
        %v364 = vunpack.c.l.b16 %v336
        %v365 = vunpack.c.l.b16 %v337
        %v366 = vunpack.c.l.b16 %v338
        %v367 = vunpack.c.l.b16 %v339
        %v368 = vpack.c.b16 %v365, %v364
        %v369 = vpack.c.b16 %v367, %v366
        %vm372 = vcmask 261120
        %v374 = vsel %vm372, %v356, 0
        %v377 = vsel %vm372, %v357, 0
        %v380 = vsel %vm372, %v358, 0
        %v383 = vsel %vm372, %v359, 0
        %385 = vmatprep.subr.bf16.mxu0 0
        %386 = vmatpush1.bf16.msra.mxu0 0
        %387 = vmatprep.subr.bf16.mxu0 0
        %388 = vmatpush1.bf16.msra.mxu0 0
        %389 = vmatprep.subr.bf16.mxu0 0
        %390 = vmatpush1.bf16.msra.mxu0 0
        %391 = vmatprep.subr.bf16.mxu0 0
        %392 = vmatpush1.bf16.msra.mxu0 0
        %393 = vmatprep.subr.bf16.mxu0 0
        %394 = vmatpush1.bf16.msra.mxu0 0
        %395 = vmatprep.subr.bf16.mxu0 0
        %396 = vmatpush1.bf16.msra.mxu0 0
        %397 = vmatprep.subr.bf16.mxu0 0
        %398 = vmatpush1.bf16.msra.mxu0 %v369
        %399 = vmatprep.subr.bf16.mxu0 0
        %400 = vmatpush1.bf16.msra.mxu0 %v368
        %401 = vmatprep.subr.bf16.mxu0 0
        %402 = vmatpush2.bf16.msra.mxu0 0
        %403 = vmatprep.subr.bf16.mxu0 0
        %404 = vmatpush2.bf16.msra.mxu0 0
        %405 = vmatprep.subr.bf16.mxu0 0
        %406 = vmatpush2.bf16.msra.mxu0 0
        %407 = vmatprep.subr.bf16.mxu0 0
        %408 = vmatpush2.bf16.msra.mxu0 0
        %409 = vmatprep.subr.bf16.mxu0 0
        %410 = vmatpush2.bf16.msra.mxu0 0
        %411 = vmatprep.subr.bf16.mxu0 0
        %412 = vmatpush2.bf16.msra.mxu0 0
        %413 = vmatprep.subr.bf16.mxu0 0
        %414 = vmatpush2.bf16.msra.mxu0 0
        %415 = vmatprep.subr.bf16.mxu0 0
        %416 = vmatpush2.bf16.msra.mxu0 0
        %417 = vmatprep.mubr.bf16.mxu0 0
        %418 = vmatmul.mubr.bf16.gmra.mxu0 %v374
        %v419 = vpop.f32.mrf.mxu0
        %v420 = vadd.f32 0.0, %v419
        %v421 = vpop.f32.mrf.mxu0
        %v422 = vpop.f32.mrf.mxu0
        %v423 = vadd.f32 0.0, %v422
        %v424 = vpop.f32.mrf.mxu0
        %425 = vmatprep.mubr.bf16.mxu0 0
        %426 = vmatmul.mubr.bf16.gmra.mxu0 %v377
        %v427 = vpop.f32.mrf.mxu0
        %v428 = vadd.f32 0.0, %v427
        %v429 = vpop.f32.mrf.mxu0
        %v430 = vpop.f32.mrf.mxu0
        %v431 = vadd.f32 0.0, %v430
        %v432 = vpop.f32.mrf.mxu0
        %433 = vmatprep.mubr.bf16.mxu0 0
        %434 = vmatmul.mubr.bf16.gmra.mxu0 %v380
        %v435 = vpop.f32.mrf.mxu0
        %v436 = vadd.f32 0.0, %v435
        %v437 = vpop.f32.mrf.mxu0
        %v438 = vpop.f32.mrf.mxu0
        %v439 = vadd.f32 0.0, %v438
        %v440 = vpop.f32.mrf.mxu0
        %441 = vmatprep.mubr.bf16.mxu0 0
        %442 = vmatmul.mubr.bf16.gmra.mxu0 %v383
        %v443 = vpop.f32.mrf.mxu0
        %v444 = vadd.f32 0.0, %v443
        %v445 = vpop.f32.mrf.mxu0
        %v446 = vpop.f32.mrf.mxu0
        %v447 = vadd.f32 0.0, %v446
        %v448 = vpop.f32.mrf.mxu0
        %449 = vdwg.mxu0
        %v450 = vrot.slane %v420, 4
        %v451 = vmax.f32 %v420, %v450
        %v452 = vrot.slane %v451, 2
        %v453 = vmax.f32 %v451, %v452
        %v454 = vrot.slane %v453, 1
        %v455 = vmax.f32 %v453, %v454
        %v456 = vrot.slane %v423, 4
        %v457 = vmax.f32 %v423, %v456
        %v458 = vrot.slane %v457, 2
        %v459 = vmax.f32 %v457, %v458
        %v460 = vrot.slane %v459, 1
        %v461 = vmax.f32 %v459, %v460
        %v462 = vrot.slane %v428, 4
        %v463 = vmax.f32 %v428, %v462
        %v464 = vrot.slane %v463, 2
        %v465 = vmax.f32 %v463, %v464
        %v466 = vrot.slane %v465, 1
        %v467 = vmax.f32 %v465, %v466
        %v468 = vrot.slane %v431, 4
        %v469 = vmax.f32 %v431, %v468
        %v470 = vrot.slane %v469, 2
        %v471 = vmax.f32 %v469, %v470
        %v472 = vrot.slane %v471, 1
        %v473 = vmax.f32 %v471, %v472
        %v474 = vrot.slane %v436, 4
        %v475 = vmax.f32 %v436, %v474
        %v476 = vrot.slane %v475, 2
        %v477 = vmax.f32 %v475, %v476
        %v478 = vrot.slane %v477, 1
        %v479 = vmax.f32 %v477, %v478
        %v480 = vrot.slane %v439, 4
        %v481 = vmax.f32 %v439, %v480
        %v482 = vrot.slane %v481, 2
        %v483 = vmax.f32 %v481, %v482
        %v484 = vrot.slane %v483, 1
        %v485 = vmax.f32 %v483, %v484
        %v486 = vrot.slane %v444, 4
        %v487 = vmax.f32 %v444, %v486
        %v488 = vrot.slane %v487, 2
        %v489 = vmax.f32 %v487, %v488
        %v490 = vrot.slane %v489, 1
        %v491 = vmax.f32 %v489, %v490
        %v492 = vrot.slane %v447, 4
        %v493 = vmax.f32 %v447, %v492
        %v494 = vrot.slane %v493, 2
        %v495 = vmax.f32 %v493, %v494
        %v496 = vrot.slane %v495, 1
        %v497 = vmax.f32 %v495, %v496
        %v498 = vld [vmem:[%s307] sm:$0x1]
        %v500 = vlaneseq
        %v501 = vshrl.u32 %v500, 7
        %v502 = vsub.s32 0, %v501
        %v503 = vrot.slane %v498, %v502
        %v505 = vadd.f32 %v455, %v503
        %v506 = vadd.f32 %v461, %v503
        %v507 = vadd.f32 %v467, %v503
        %v508 = vadd.f32 %v473, %v503
        %v509 = vadd.f32 %v479, %v503
        %v510 = vadd.f32 %v485, %v503
        %v511 = vadd.f32 %v491, %v503
        %v512 = vadd.f32 %v497, %v503
        %v521 = vrot.slane %v506, 7
        %vm522 = vcmask 1041409
        %v523 = vsel %vm522, %v521, %v505
        %v524 = vrot.slane %v507, 6
        %vm525 = vcmask 1042434
        %v526 = vsel %vm525, %v524, %v523
        %v527 = vrot.slane %v508, 5
        %vm528 = vcmask 1043459
        %v529 = vsel %vm528, %v527, %v526
        %v530 = vrot.slane %v509, 4
        %vm531 = vcmask 1044484
        %v532 = vsel %vm531, %v530, %v529
        %v533 = vrot.slane %v510, 3
        %vm534 = vcmask 1045509
        %v535 = vsel %vm534, %v533, %v532
        %v536 = vrot.slane %v511, 2
        %vm537 = vcmask 1046534
        %v538 = vsel %vm537, %v536, %v535
        %v539 = vrot.slane %v512, 1
        %vm540 = vcmask 1047559
        %v541 = vsel %vm540, %v539, %v538
        %543 = vst [vmem:[%s315] sm:$0xff] %v541
        %544 = vmax.xlane.f32.xlu0 %v541
        %v545 = vpop.xlane.xlu0 %544
        %v546 = vld [vmem:[#allocation2] sm:$0xff]
        %v547 = vmax.f32 %v546, %v545
        %v548 = vld [vmem:[#allocation3] sm:$0xff]
        %v549 = vsub.f32 %v546, %v547
        %v550 = vmul.f32 %v549, 1.442695
        %v551 = vpow.pop %v550
        %v552 = vmul.f32 %v548, %v551
        %554 = vset.pattern.permute.xlu0 0
        %555 = vperm.xlu0 %554, %v547
        %v556 = vpop.permute.xlu0 %555
        %v557 = vrot.slane %v556, 1
        %v558 = vrot.slane %v556, 2
        %v559 = vrot.slane %v556, 3
        %v560 = vrot.slane %v556, 4
        %v561 = vrot.slane %v556, 5
        %v562 = vrot.slane %v556, 6
        %v563 = vrot.slane %v556, 7
        %v572 = vsub.f32 %v505, %v556
        %v573 = vsub.f32 %v506, %v557
        %v574 = vsub.f32 %v507, %v558
        %v575 = vsub.f32 %v508, %v559
        %v576 = vsub.f32 %v509, %v560
        %v577 = vsub.f32 %v510, %v561
        %v578 = vsub.f32 %v511, %v562
        %v579 = vsub.f32 %v512, %v563
        %v580 = vmul.f32 %v572, 1.442695
        %v581 = vpow.pop %v580
        %v582 = vmul.f32 %v573, 1.442695
        %v583 = vpow.pop %v582
        %v584 = vmul.f32 %v574, 1.442695
        %v585 = vpow.pop %v584
        %v586 = vmul.f32 %v575, 1.442695
        %v587 = vpow.pop %v586
        %v588 = vmul.f32 %v576, 1.442695
        %v589 = vpow.pop %v588
        %v590 = vmul.f32 %v577, 1.442695
        %v591 = vpow.pop %v590
        %v592 = vmul.f32 %v578, 1.442695
        %v593 = vpow.pop %v592
        %v594 = vmul.f32 %v579, 1.442695
        %v595 = vpow.pop %v594
        %v604 = vrot.slane %v583, 7
        %v605 = vsel %vm522, %v604, %v581
        %v606 = vrot.slane %v585, 6
        %v607 = vsel %vm525, %v606, %v605
        %v608 = vrot.slane %v587, 5
        %v609 = vsel %vm528, %v608, %v607
        %v610 = vrot.slane %v589, 4
        %v611 = vsel %vm531, %v610, %v609
        %v612 = vrot.slane %v591, 3
        %v613 = vsel %vm534, %v612, %v611
        %v614 = vrot.slane %v593, 2
        %v615 = vsel %vm537, %v614, %v613
        %v616 = vrot.slane %v595, 1
        %v617 = vsel %vm540, %v616, %v615
        %619 = vadd.xlane.f32.xlu0 %v617
        %v620 = vpop.xlane.xlu0 %619
        %v621 = vadd.f32 %v552, %v620
        %vm622 = vcmask 7168
        %623 = vst.msk [vmem:[#allocation3] sm:$0xff] %vm622, %v621
        %624 = vst.msk [vmem:[#allocation2] sm:$0xff] %vm622, %v547
        %p625 = scmp.eq.s32.totalorder %s21, 2
        // Predicated region
        $region78: #{generator2_forward.1} parent=68 // pred_check
          %p626 = pneg %p625
        $region79: #{generator2_forward.1} parent=68 // pred_check_branch
          %628 = sbr.rel (%p626) target = $region81
        $region80: #{generator2_forward.1} parent=68 // pred_region
          %v629 = vld [vmem:[#allocation2] sm:$0xff]
          %v630 = vld [vmem:[#allocation3] sm:$0xff]
          %v631 = vlog2.pop %v630
          %v632 = vmul.f32 %v631, 0.6931472
          %v633 = vadd.f32 %v629, %v632
          %634 = vst.msk [vmem:[%s319] sm:$0xff] %vm622, %v633
        $region81: #{generator2_forward.1} parent=68 // pred_fallthru
          _
        %p635 = scmp.lt.s32.totalorder %s20, 1
        %s636 = scalar_select %p635, %s20, 1
        %p637 = scmp.lt.s32.totalorder %s21, 2
        %s638 = scalar_select %p637, %s21, 2
        %s639 = smul.addr %s636, 3
        %s640 = sadd.s32 %s638, %s639
        %s641 = smul.addr %s640, 8
        %s642 = scalar_lea.vmem %s3, %s641
        %p643 = scmp.lt.s32.totalorder %s20, 1
        %s644 = scalar_select %p643, %s20, 1
        %s645 = smul.addr %s644, 8
        %s646 = scalar_lea.vmem %s4, %s645
        // Predicated region
        $region82: #{generator2_forward.1} parent=68 // pred_check
          %p647 = pneg %p126
        $region83: #{generator2_forward.1} parent=68 // pred_check_branch
          %649 = sbr.rel (%p647) target = $region85
        $region84: #{generator2_forward.1} parent=68 // pred_region
          _
        $region85: #{generator2_forward.1} parent=68 // pred_fallthru
          _
        // Predicated region
        $region86: #{generator2_forward.1} parent=68 // pred_check
          %p650 = pneg %p152
        $region87: #{generator2_forward.1} parent=68 // pred_check_branch
          %652 = sbr.rel (%p650) target = $region89
        $region88: #{generator2_forward.1} parent=68 // pred_region
          _
        $region89: #{generator2_forward.1} parent=68 // pred_fallthru
          _
      $region69: #{generator2_forward.1} parent=5 // pred_fallthru
        _
      %p653 = scmp.le.s32.totalorder 2, %s11
      // Predicated region
      $region90: #{generator2_forward.1} parent=5 // pred_check
        %p654 = pneg %p653
      $region91: #{generator2_forward.1} parent=5 // pred_check_branch
        %656 = sbr.rel (%p654) target = $region93
      $region92: #{generator2_forward.1} parent=5 // pred_region
        %s657 = ssub.s32 %s11, 2
        // Predicated region
        $region94: #{generator2_forward.1} parent=92 // pred_check
          %p658 = pneg %p132
        $region95: #{generator2_forward.1} parent=92 // pred_check_branch
          %660 = sbr.rel (%p658) target = $region97
        $region96: #{generator2_forward.1} parent=92 // pred_region
          %p661 = scmp.lt.s32.totalorder %s22, 1
          %s662 = scalar_select %p661, %s22, 1
          %p663 = scmp.lt.s32.totalorder %s23, 2
          %s664 = scalar_select %p663, %s23, 2
          %s665 = smul.addr %s662, 3
          %s666 = sadd.s32 %s664, %s665
          %s667 = smul.addr %s666, 8
          %s668 = scalar_lea.vmem %s3, %s667
        $region97: #{generator2_forward.1} parent=92 // pred_fallthru
          _
        // Predicated region
        $region98: #{generator2_forward.1} parent=92 // pred_check
          %p669 = pneg %p158
        $region99: #{generator2_forward.1} parent=92 // pred_check_branch
          %671 = sbr.rel (%p669) target = $region101
        $region100: #{generator2_forward.1} parent=92 // pred_region
          %p672 = scmp.lt.s32.totalorder %s22, 1
          %s673 = scalar_select %p672, %s22, 1
          %s674 = smul.addr %s673, 8
          %s675 = scalar_lea.vmem %s4, %s674
        $region101: #{generator2_forward.1} parent=92 // pred_fallthru
          _
      $region93: #{generator2_forward.1} parent=5 // pred_fallthru
        _
    $region6: #{generator2_forward.1} parent=1 // loop_footer
      %s15 = sadd.s32 1, %s11
    $region7: #{generator2_forward.1} parent=1 // loop_footer_branch
      %10 = sbr.rel target = $region3
    $region8: #{generator2_forward.1} parent=1 // loop_exit
      _

</llo_original>
